<compile_context>
chip_gen: v5e
topology: v5e:2x2
jax: 0.10.0
libtpu: 0.0.40
codegen_flags: <defaults>
</compile_context>

<pallas_src>
import jax
import jax.numpy as jnp
import numpy as np
from jax.experimental import pallas as pl
from jax.experimental.pallas import tpu as pltpu


def _length_regulator_kernel(cum_excl_ref,   # VMEM block: (1, 1, L) int32
                             cum_incl_ref,   # VMEM block: (1, 1, L) int32
                             x_ref,          # VMEM block: (1, L, D) native dtype
                             out_ref):       # VMEM block: (1, TT, D)
    t = pl.program_id(1)
    L = x_ref.shape[1]
    TT = out_ref.shape[1]

    # Shift the (1, L) cumulative sums by this tile's starting frame so the
    # big (TT, L) iota below is a compile-time constant (2*L int32 subs
    # instead of TT*L adds per tile).
    start = t * TT
    lo = cum_excl_ref[0] - start                                 # (1, L)
    hi = cum_incl_ref[0] - start                                 # (1, L)

    # Repeat mask for this tile: R[t, i] = 1 iff cum_excl[i] <= t < cum_incl[i].
    t_ids = jax.lax.broadcasted_iota(jnp.int32, (TT, L), 0)      # constant
    mask = jnp.logical_and(t_ids >= lo, t_ids < hi)              # (TT, L) bool
    repeat = mask.astype(x_ref.dtype)                            # 0/1

    # Expansion as one MXU matmul in x's native dtype, f32 accumulation.
    out_ref[0] = jnp.dot(repeat, x_ref[0],
                         preferred_element_type=jnp.float32).astype(out_ref.dtype)


def length_regulator(x, duration, max_len, *, t_tile=None):
    """x: (B, L, D) float; duration: (B, L) int.

    Returns (output (B, max_len, D), mel_len (B,) int32).
    """
    B, L, D = x.shape

    # Clamp durations (PyTorch uses max(int(d), 0)) and pad the token axis
    # (the matmul K dimension) to a multiple of 128 with zero durations; the
    # padded rows of x never match the mask, so zeros are fine.
    d = jnp.maximum(duration.astype(jnp.int32), 0)               # (B, L)
    L_pad = ((L + 127) // 128) * 128
    if L_pad != L:
        x = jnp.pad(x, ((0, 0), (0, L_pad - L), (0, 0)))
        d = jnp.pad(d, ((0, 0), (0, L_pad - L)))

    # Cumulative sums and mel_len in plain XLA (cheap, keeps the kernel lean).
    cum_incl = jnp.cumsum(d, axis=1, dtype=jnp.int32)            # (B, L_pad)
    cum_excl = cum_incl - d                                      # (B, L_pad)
    mel_len = cum_incl[:, -1]                                    # (B,) int32

    if t_tile is None:
        # One tile if it fits; otherwise large lane/sublane-aligned tiles
        # (few grid steps, big unmasked output stores, small VMEM footprint).
        t_tile = max_len if max_len <= 512 else 512
    n_t = pl.cdiv(max_len, t_tile)

    out = pl.pallas_call(
        _length_regulator_kernel,
        out_shape=jax.ShapeDtypeStruct((B, max_len, D), x.dtype),
        grid_spec=pltpu.PrefetchScalarGridSpec(
            num_scalar_prefetch=0,
            grid=(B, n_t),
            in_specs=[
                pl.BlockSpec((1, 1, L_pad), lambda b, t: (b, 0, 0)),   # cum_excl (resident over t)
                pl.BlockSpec((1, 1, L_pad), lambda b, t: (b, 0, 0)),   # cum_incl (resident over t)
                pl.BlockSpec((1, L_pad, D), lambda b, t: (b, 0, 0)),   # x        (resident over t)
            ],
            out_specs=pl.BlockSpec((1, t_tile, D), lambda b, t: (b, t, 0)),
        ),
        compiler_params=pltpu.CompilerParams(
            dimension_semantics=("parallel", "parallel"),
        ),
    )(cum_excl.reshape(B, 1, L_pad), cum_incl.reshape(B, 1, L_pad), x)

    return out, mel_len


if __name__ == "__main__":
    B, L, D = 2, 8, 128          # D multiple of 128 -> lane-dense output stores
    max_len = 48
    t_tile = 16                  # exercises the T-tiling path (3 tiles)

    key = jax.random.PRNGKey(0)
    kx, kd = jax.random.split(key)
    x = jax.random.normal(kx, (B, L, D), dtype=jnp.float32)
    duration = jax.random.randint(kd, (B, L), 0, 5, dtype=jnp.int32)  # sum <= 32 <= max_len

    out, mel_len = length_regulator(x, duration, max_len, t_tile=t_tile)
    out = jax.block_until_ready(out)
    mel_len = jax.block_until_ready(mel_len)

    # Pure-Python reference reproducing the PyTorch LR/expand/pad semantics.
    x_np = np.asarray(x)
    d_np = np.asarray(duration)
    ref = np.zeros((B, max_len, D), dtype=np.float32)
    ref_len = np.zeros((B,), dtype=np.int32)
    for b in range(B):
        t = 0
        for i in range(L):
            for _ in range(max(int(d_np[b, i]), 0)):
                ref[b, t] = x_np[b, i]
                t += 1
        ref_len[b] = t

    assert np.allclose(np.asarray(out), ref, atol=1e-5), "expanded output mismatch"
    assert np.array_equal(np.asarray(mel_len), ref_len), "mel_len mismatch"
    print("KERNEL_OK")
</pallas_src>

<mosaic_0001>
module attributes {stable_mosaic.version = 11 : i64} {
  func.func @_length_regulator_kernel(%arg0: i32, %arg1: i32, %arg2: memref<1x1x128xi32, #tpu.memory_space<vmem>>, %arg3: memref<1x1x128xi32, #tpu.memory_space<vmem>>, %arg4: memref<1x128x128xf32, #tpu.memory_space<vmem>>, %arg5: memref<1x16x128xf32, #tpu.memory_space<vmem>>) attributes {dimension_semantics = [#tpu.dimension_semantics<parallel>, #tpu.dimension_semantics<parallel>], iteration_bounds = array<i64: 2, 3>, scalar_prefetch = 0 : i64, scratch_operands = 0 : i64, tpu.core_type = #tpu.core_type<tc>, window_params = [{transform_indices = @transform_0, window_bounds = array<i64: 1, 1, 128>}, {transform_indices = @transform_1, window_bounds = array<i64: 1, 1, 128>}, {transform_indices = @transform_2, window_bounds = array<i64: 1, 128, 128>}, {transform_indices = @transform_3, window_bounds = array<i64: 1, 16, 128>}]} {
    %c16_i32 = arith.constant 16 : i32
    %0 = arith.muli %arg1, %c16_i32 : i32
    %c0 = arith.constant 0 : index
    %c0_0 = arith.constant 0 : index
    %c0_1 = arith.constant 0 : index
    %1 = vector.load %arg2[%c0, %c0_0, %c0_1] : memref<1x1x128xi32, #tpu.memory_space<vmem>>, vector<1x1x128xi32>
    %2 = vector.shape_cast %1 : vector<1x1x128xi32> to vector<1x128xi32>
    %3 = vector.broadcast %0 : i32 to vector<1x128xi32>
    %4 = arith.subi %2, %3 : vector<1x128xi32>
    %c0_2 = arith.constant 0 : index
    %c0_3 = arith.constant 0 : index
    %c0_4 = arith.constant 0 : index
    %5 = vector.load %arg3[%c0_2, %c0_3, %c0_4] : memref<1x1x128xi32, #tpu.memory_space<vmem>>, vector<1x1x128xi32>
    %6 = vector.shape_cast %5 : vector<1x1x128xi32> to vector<1x128xi32>
    %7 = vector.broadcast %0 : i32 to vector<1x128xi32>
    %8 = arith.subi %6, %7 : vector<1x128xi32>
    %9 = tpu.iota {dimensions = array<i32: 0>} : vector<16x128xi32>
    %10 = vector.broadcast %4 : vector<1x128xi32> to vector<16x128xi32>
    %11 = arith.cmpi sge, %9, %10 : vector<16x128xi32>
    %12 = vector.broadcast %8 : vector<1x128xi32> to vector<16x128xi32>
    %13 = arith.cmpi slt, %9, %12 : vector<16x128xi32>
    %14 = arith.andi %11, %13 : vector<16x128xi1>
    %15 = arith.extui %14 : vector<16x128xi1> to vector<16x128xi32>
    %16 = arith.sitofp %15 : vector<16x128xi32> to vector<16x128xf32>
    %c0_5 = arith.constant 0 : index
    %c0_6 = arith.constant 0 : index
    %c0_7 = arith.constant 0 : index
    %17 = vector.load %arg4[%c0_5, %c0_6, %c0_7] : memref<1x128x128xf32, #tpu.memory_space<vmem>>, vector<1x128x128xf32>
    %18 = vector.shape_cast %17 : vector<1x128x128xf32> to vector<128x128xf32>
    %cst = arith.constant dense<0.000000e+00> : vector<16x128xf32>
    %19 = tpu.matmul %16, %18, %cst {dimension_numbers = #tpu.dot_dimension_numbers<[1], [0], [0], [1], [0, 0, 1, 1], [], []>} : vector<16x128xf32>, vector<128x128xf32>, vector<16x128xf32> -> vector<16x128xf32>
    %c0_8 = arith.constant 0 : index
    %c0_9 = arith.constant 0 : index
    %c0_10 = arith.constant 0 : index
    %20 = vector.load %arg5[%c0_8, %c0_9, %c0_10] : memref<1x16x128xf32, #tpu.memory_space<vmem>>, vector<1x16x128xf32>
    %21 = vector.shape_cast %20 : vector<1x16x128xf32> to vector<16x128xf32>
    %22 = vector.shape_cast %19 : vector<16x128xf32> to vector<1x16x128xf32>
    tpu.vector_store %arg5[%c0_8, %c0_9, %c0_10], %22 {strides = array<i32>} : memref<1x16x128xf32, #tpu.memory_space<vmem>>, vector<1x16x128xf32>,
    return
  }
  func.func @transform_0(%arg0: i32, %arg1: i32) -> (i32, i32, i32) {
    %c0_i32 = arith.constant 0 : i32
    %c0_i32_0 = arith.constant 0 : i32
    %c0_i32_1 = arith.constant 0 : i32
    return %arg0, %c0_i32, %c0_i32_0 : i32, i32, i32
  }
  func.func @transform_1(%arg0: i32, %arg1: i32) -> (i32, i32, i32) {
    %c0_i32 = arith.constant 0 : i32
    %c0_i32_0 = arith.constant 0 : i32
    %c0_i32_1 = arith.constant 0 : i32
    return %arg0, %c0_i32, %c0_i32_0 : i32, i32, i32
  }
  func.func @transform_2(%arg0: i32, %arg1: i32) -> (i32, i32, i32) {
    %c0_i32 = arith.constant 0 : i32
    %c0_i32_0 = arith.constant 0 : i32
    %c0_i32_1 = arith.constant 0 : i32
    return %arg0, %c0_i32, %c0_i32_0 : i32, i32, i32
  }
  func.func @transform_3(%arg0: i32, %arg1: i32) -> (i32, i32, i32) {
    %c0_i32 = arith.constant 0 : i32
    %c0_i32_0 = arith.constant 0 : i32
    return %arg0, %arg1, %c0_i32 : i32, i32, i32
  }
}

</mosaic_0001>

<llo_original>
// kernel: tpu_custom_call.1
$region0: #{tpu_custom_call.1}
  #allocation0 [shape = 'u32[]', space=smem, size = 0x4, offset = 0x4, fixed_abs, tag = 'smem constant byte address 0x4 - core index']
  #allocation1 [shape = 'u32[72,128]{1,0:T(1,128)}', space=vmem, size = 0x9000, scoped, tag = 'internal scratch']
  %s0 = inlined_call_operand.hbm [shape: s32[2,1,128], index: 0, kind: input, shape index: {}]
  %s1 = inlined_call_operand.hbm [shape: s32[2,1,128], index: 1, kind: input, shape index: {}]
  %s2 = inlined_call_operand.hbm [shape: f32[2,128,128], index: 2, kind: input, shape index: {}]
  %s3 = inlined_call_operand.hbm [shape: f32[2,48,128], index: 3, kind: output, shape index: {}]
  %s4 = sld [smem:[#allocation0]]
  $region57: #{tpu_custom_call.1} parent=0
    _
  %s6 = ssub.s32 1, %s4
  %s7 = scalar_select 0, %s6, %s4
  $region1: #{tpu_custom_call.1} parent=0
    #allocation2 [shape = 'u8[1024]{0}', space=vmem, size = 0x400, scoped, tag = 'input window, operand 0']
    #allocation3 [shape = 's32[2]{0}', space=sflag, size = 0x8, scoped, tag = 'scoped memory for tpu_custom_call.1']
    #allocation4 [shape = 's32[2]{0}', space=sflag, size = 0x8, scoped, tag = 'scoped memory for tpu_custom_call.1']
    #allocation5 [shape = 'u8[1024]{0}', space=vmem, size = 0x400, scoped, tag = 'input window, operand 1']
    #allocation6 [shape = 's32[2]{0}', space=sflag, size = 0x8, scoped, tag = 'scoped memory for tpu_custom_call.1']
    #allocation7 [shape = 'u8[131072]{0}', space=vmem, size = 0x20000, scoped, tag = 'input window, operand 2']
    #allocation8 [shape = 'u8[16384]{0}', space=vmem, size = 0x4000, scoped, tag = 'output window, operand 0']
    %8 = vsyncpa [#allocation3], 0
    %s9 = scalar_lea.sflag [#allocation3], 1
    %10 = vsyncpa %s9, 0
    %11 = vsyncpa [#allocation6], 0
    %s12 = scalar_lea.sflag [#allocation6], 1
    %13 = vsyncpa %s12, 0
    %14 = vsyncpa [#allocation4], 0
    %s15 = scalar_lea.sflag [#allocation4], 1
    %16 = vsyncpa %s15, 0
    loop: start=0, step=1, limit=8
    $region2: #{tpu_custom_call.1} parent=1 // loop_pre_header
      _
    $region3: #{tpu_custom_call.1} parent=1 // loop_header
      %s18 = sphi 0, %s22
      %p19 = scmp.ge.s32.totalorder %s18, 8
      %s25 = sphi 0, %s37
      %s26 = sphi 0, %s33
      %s27 = sphi 0, %s25
      %s28 = sphi 0, %s26
      %s29 = sphi 0, %s27
      %s30 = sphi 0, %s28
      %s40 = sphi 0, %s42
      %s43 = sphi 0, %s40
      %s44 = sphi 0, %s43
      %s60 = sphi 0, %s44
      %s66 = sphi 0, %s68
      %s69 = sphi 0, %s66
      %s70 = sphi 0, %s69
      %s86 = sphi 0, %s70
      %s92 = sphi 0, %s94
      %s95 = sphi 0, %s92
      %s96 = sphi 0, %s95
      %s112 = sphi 0, %s96
      %s120 = sphi 0, %s122
      %s123 = sphi 0, %s120
      %s124 = sphi 0, %s123
      %s140 = sphi 0, %s124
    $region4: #{tpu_custom_call.1} parent=1 // loop_header_branch
      %21 = sbr.rel (%p19) target = $region8
    $region5: #{tpu_custom_call.1} parent=1 // loop_body
      %s23 = ssub.s32 %s18, 1
      %s24 = ssub.s32 %s18, 2
      %s31 = sadd.s32 1, %s26
      %p32 = scmp.ge.s32.totalorder %s31, 3
      %s33 = scalar_select %p32, 0, %s31
      %s34 = sadd.s32 1, %s25
      %s35 = scalar_select %p32, %s34, %s25
      %p36 = scmp.ge.s32.totalorder %s35, 2
      %s37 = scalar_select %p36, 0, %s35
      %s38 = ssub.s32 %s25, %s37
      %p39 = scmp.eq.s32.totalorder %s38, 0
      %s41 = sadd.s32 %s40, 1
      %s42 = scalar_select %p39, %s40, %s41
      %p45 = pneg %p39
      %p46 = scmp.eq.s32.totalorder %s18, 5
      %p47 = por %p45, %p46
      %p48 = scmp.ne.s32.totalorder %s40, %s43
      %p49 = scmp.eq.s32.totalorder %s18, 0
      %p50 = por %p48, %p49
      %p51 = scmp.ne.s32.totalorder %s40, %s43
      %p52 = scmp.eq.s32.totalorder %s23, 5
      %p53 = por %p51, %p52
      %p54 = scmp.ne.s32.totalorder %s43, %s44
      %p55 = scmp.eq.s32.totalorder %s23, 0
      %p56 = por %p54, %p55
      %p57 = scmp.ne.s32.totalorder %s43, %s44
      %p58 = scmp.eq.s32.totalorder %s24, 5
      %p59 = por %p57, %p58
      %p61 = scmp.ne.s32.totalorder %s44, %s60
      %p62 = scmp.eq.s32.totalorder %s24, 0
      %p63 = por %p61, %p62
      %s64 = ssub.s32 %s25, %s37
      %p65 = scmp.eq.s32.totalorder %s64, 0
      %s67 = sadd.s32 %s66, 1
      %s68 = scalar_select %p65, %s66, %s67
      %p71 = pneg %p65
      %p72 = scmp.eq.s32.totalorder %s18, 5
      %p73 = por %p71, %p72
      %p74 = scmp.ne.s32.totalorder %s66, %s69
      %p75 = scmp.eq.s32.totalorder %s18, 0
      %p76 = por %p74, %p75
      %p77 = scmp.ne.s32.totalorder %s66, %s69
      %p78 = scmp.eq.s32.totalorder %s23, 5
      %p79 = por %p77, %p78
      %p80 = scmp.ne.s32.totalorder %s69, %s70
      %p81 = scmp.eq.s32.totalorder %s23, 0
      %p82 = por %p80, %p81
      %p83 = scmp.ne.s32.totalorder %s69, %s70
      %p84 = scmp.eq.s32.totalorder %s24, 5
      %p85 = por %p83, %p84
      %p87 = scmp.ne.s32.totalorder %s70, %s86
      %p88 = scmp.eq.s32.totalorder %s24, 0
      %p89 = por %p87, %p88
      %s90 = ssub.s32 %s25, %s37
      %p91 = scmp.eq.s32.totalorder %s90, 0
      %s93 = sadd.s32 %s92, 1
      %s94 = scalar_select %p91, %s92, %s93
      %p97 = pneg %p91
      %p98 = scmp.eq.s32.totalorder %s18, 5
      %p99 = por %p97, %p98
      %p100 = scmp.ne.s32.totalorder %s92, %s95
      %p101 = scmp.eq.s32.totalorder %s18, 0
      %p102 = por %p100, %p101
      %p103 = scmp.ne.s32.totalorder %s92, %s95
      %p104 = scmp.eq.s32.totalorder %s23, 5
      %p105 = por %p103, %p104
      %p106 = scmp.ne.s32.totalorder %s95, %s96
      %p107 = scmp.eq.s32.totalorder %s23, 0
      %p108 = por %p106, %p107
      %p109 = scmp.ne.s32.totalorder %s95, %s96
      %p110 = scmp.eq.s32.totalorder %s24, 5
      %p111 = por %p109, %p110
      %p113 = scmp.ne.s32.totalorder %s96, %s112
      %p114 = scmp.eq.s32.totalorder %s24, 0
      %p115 = por %p113, %p114
      %s116 = ssub.s32 %s25, %s37
      %s117 = ssub.s32 %s26, %s33
      %s118 = sor.u32 %s116, %s117
      %p119 = scmp.eq.s32.totalorder %s118, 0
      %s121 = sadd.s32 %s120, 1
      %s122 = scalar_select %p119, %s120, %s121
      %p125 = pneg %p119
      %p126 = scmp.eq.s32.totalorder %s18, 5
      %p127 = por %p125, %p126
      %p128 = scmp.ne.s32.totalorder %s120, %s123
      %p129 = scmp.eq.s32.totalorder %s18, 0
      %p130 = por %p128, %p129
      %p131 = scmp.ne.s32.totalorder %s120, %s123
      %p132 = scmp.eq.s32.totalorder %s23, 5
      %p133 = por %p131, %p132
      %p134 = scmp.ne.s32.totalorder %s123, %s124
      %p135 = scmp.eq.s32.totalorder %s23, 0
      %p136 = por %p134, %p135
      %p137 = scmp.ne.s32.totalorder %s123, %s124
      %p138 = scmp.eq.s32.totalorder %s24, 5
      %p139 = por %p137, %p138
      %p141 = scmp.ne.s32.totalorder %s124, %s140
      %p142 = scmp.eq.s32.totalorder %s24, 0
      %p143 = por %p141, %p142
      %p144 = scmp.le.s32.totalorder 1, %s18
      %p145 = scmp.lt.s32.totalorder %s18, 7
      %p146 = pnand %p144, %p145
      %p147 = pneg %p146
      // Predicated region
      $region9: #{tpu_custom_call.1} parent=5 // pred_check
        _
      $region10: #{tpu_custom_call.1} parent=5 // pred_check_branch
        %149 = sbr.rel (%p146) target = $region12
      $region11: #{tpu_custom_call.1} parent=5 // pred_region
        %s150 = ssub.s32 %s18, 1
      $region12: #{tpu_custom_call.1} parent=5 // pred_fallthru
        _
      %p151 = scmp.lt.s32.totalorder %s18, 6
      // Predicated region
      $region13: #{tpu_custom_call.1} parent=5 // pred_check
        %p152 = pneg %p151
      $region14: #{tpu_custom_call.1} parent=5 // pred_check_branch
        %154 = sbr.rel (%p152) target = $region16
      $region15: #{tpu_custom_call.1} parent=5 // pred_region
        // Predicated region
        $region17: #{tpu_custom_call.1} parent=15 // pred_check
          %p155 = pneg %p50
        $region18: #{tpu_custom_call.1} parent=15 // pred_check_branch
          %157 = sbr.rel (%p155) target = $region20
        $region19: #{tpu_custom_call.1} parent=15 // pred_region
          %s158 = sand.u32 %s40, 1
          %s159 = scalar_lea.sflag [#allocation3], %s158
          %s160 = sand.u32 %s40, 1
          %s161 = scalar_lea.vmem [#allocation2], %s160
          %163 = vsyncadd %s159, 0
          %s164 = scalar_lea.hbm %s0, %s25
          %s166 = sshll.u32 %s164, 4
          %s167 = int_to_ptr.hbm [resolvable:$true] %s166
          %s168 = sshll.u32 %s161, 4
          %s169 = int_to_ptr.vmem [resolvable:$true] %s168
          %171 = dma.hbm_to_vmem [thread:$0]  %s167, 16, %s169, %s159
        $region20: #{tpu_custom_call.1} parent=15 // pred_fallthru
          _
        // Predicated region
        $region21: #{tpu_custom_call.1} parent=15 // pred_check
          %p172 = pneg %p76
        $region22: #{tpu_custom_call.1} parent=15 // pred_check_branch
          %174 = sbr.rel (%p172) target = $region24
        $region23: #{tpu_custom_call.1} parent=15 // pred_region
          %s175 = sand.u32 %s18, 1
          %s176 = scalar_lea.sflag [#allocation6], %s175
          %s177 = sand.u32 %s66, 1
          %s178 = scalar_lea.vmem [#allocation5], %s177
          %180 = vsyncadd %s176, 0
          %s181 = scalar_lea.hbm %s1, %s25
          %s183 = sshll.u32 %s181, 4
          %s184 = int_to_ptr.hbm [resolvable:$true] %s183
          %s185 = sshll.u32 %s178, 4
          %s186 = int_to_ptr.vmem [resolvable:$true] %s185
          %188 = dma.hbm_to_vmem [thread:$0]  %s184, 16, %s186, %s176
        $region24: #{tpu_custom_call.1} parent=15 // pred_fallthru
          _
        // Predicated region
        $region25: #{tpu_custom_call.1} parent=15 // pred_check
          %p189 = pneg %p102
        $region26: #{tpu_custom_call.1} parent=15 // pred_check_branch
          %191 = sbr.rel (%p189) target = $region28
        $region27: #{tpu_custom_call.1} parent=15 // pred_region
          %s192 = sand.u32 %s18, 1
          %s193 = scalar_lea.sflag [#allocation6], %s192
          %s194 = sand.u32 %s92, 1
          %s195 = smul.addr %s194, 128
          %s196 = scalar_lea.vmem [#allocation7], %s195
          %198 = vsyncadd %s193, 0
          %s199 = smul.addr %s25, 16
          %s200 = smul.addr %s199, 8
          %s201 = scalar_lea.hbm %s2, %s200
          %s202 = sshll.u32 %s201, 4
          %s203 = int_to_ptr.hbm [resolvable:$true] %s202
          %s204 = sshll.u32 %s196, 4
          %s205 = int_to_ptr.vmem [resolvable:$true] %s204
          %210 = dma.hbm_to_vmem [thread:$0]  %s203, 2048, %s205, %s193, 128, 128, 8
        $region28: #{tpu_custom_call.1} parent=15 // pred_fallthru
          _
      $region16: #{tpu_custom_call.1} parent=5 // pred_fallthru
        _
      %p211 = scmp.le.s32.totalorder 1, %s18
      %p212 = scmp.lt.s32.totalorder %s18, 7
      %p213 = pnand %p211, %p212
      %p214 = pneg %p213
      // Predicated region
      $region29: #{tpu_custom_call.1} parent=5 // pred_check
        _
      $region30: #{tpu_custom_call.1} parent=5 // pred_check_branch
        %216 = sbr.rel (%p213) target = $region32
      $region31: #{tpu_custom_call.1} parent=5 // pred_region
        %s217 = ssub.s32 %s18, 1
        %s218 = sand.u32 %s43, 1
        %s219 = scalar_lea.sflag [#allocation3], %s218
        %s220 = sand.u32 %s43, 1
        %s221 = scalar_lea.vmem [#allocation2], %s220
        // Predicated region
        $region33: #{tpu_custom_call.1} parent=31 // pred_check
          %p222 = pneg %p56
        $region34: #{tpu_custom_call.1} parent=31 // pred_check_branch
          %224 = sbr.rel (%p222) target = $region36
        $region35: #{tpu_custom_call.1} parent=31 // pred_region
          %226 = dma.done %s219, 16
        $region36: #{tpu_custom_call.1} parent=31 // pred_fallthru
          _
        %s227 = sand.u32 %s23, 1
        %s228 = scalar_lea.sflag [#allocation6], %s227
        %s229 = sand.u32 %s69, 1
        %s230 = scalar_lea.vmem [#allocation5], %s229
        // Predicated region
        $region37: #{tpu_custom_call.1} parent=31 // pred_check
          %p231 = pneg %p82
        $region38: #{tpu_custom_call.1} parent=31 // pred_check_branch
          %233 = sbr.rel (%p231) target = $region40
        $region39: #{tpu_custom_call.1} parent=31 // pred_region
          %235 = dma.done %s228, 16
        $region40: #{tpu_custom_call.1} parent=31 // pred_fallthru
          _
        %s236 = sand.u32 %s23, 1
        %s237 = scalar_lea.sflag [#allocation6], %s236
        %s238 = sand.u32 %s95, 1
        %s239 = smul.addr %s238, 128
        %s240 = scalar_lea.vmem [#allocation7], %s239
        // Predicated region
        $region41: #{tpu_custom_call.1} parent=31 // pred_check
          %p241 = pneg %p108
        $region42: #{tpu_custom_call.1} parent=31 // pred_check_branch
          %243 = sbr.rel (%p241) target = $region44
        $region43: #{tpu_custom_call.1} parent=31 // pred_region
          %245 = dma.done %s237, 2048
        $region44: #{tpu_custom_call.1} parent=31 // pred_fallthru
          _
        %s246 = sand.u32 %s43, 1
        %s247 = scalar_lea.sflag [#allocation3], %s246
        %s248 = sand.u32 %s43, 1
        %s249 = scalar_lea.vmem [#allocation2], %s248
        %p250 = pneg %p56
        %p251 = pneg %p53
        %s252 = sand.u32 %s23, 1
        %s253 = scalar_lea.sflag [#allocation6], %s252
        %s254 = sand.u32 %s69, 1
        %s255 = scalar_lea.vmem [#allocation5], %s254
        %p256 = pneg %p82
        %p257 = pneg %p79
        %s258 = sand.u32 %s23, 1
        %s259 = scalar_lea.sflag [#allocation6], %s258
        %s260 = sand.u32 %s95, 1
        %s261 = smul.addr %s260, 128
        %s262 = scalar_lea.vmem [#allocation7], %s261
        %p263 = pneg %p108
        %p264 = pneg %p105
        %p265 = pneg %p136
        %p266 = pneg %p133
        %s267 = sand.u32 %s123, 1
        %s268 = scalar_lea.sflag [#allocation4], %s267
        %s269 = sand.u32 %s123, 1
        %s270 = smul.addr %s269, 16
        %s271 = scalar_lea.vmem [#allocation8], %s270
        %s272 = smul.u32 2, %s28
        %s273 = smul.u32 %s28, 16
        %v274 = vld [vmem:[%s221] sm:$0x1]
        %v275 = vstv %s273
        %v276 = vsub.s32 %v274, %v275
        %v277 = vld [vmem:[%s230] sm:$0x1]
        %v278 = vsub.s32 %v277, %v275
        %v279 = vlaneseq
        %v280 = vshrl.u32 %v279, 7
        %v281 = vadd.s32 %v280, 8
        %v282 = vperm.slane %v276, 0
        %vm283 = vcmp.ge.s32.totalorder %v280, %v282
        %vm284 = vcmp.ge.s32.totalorder %v281, %v282
        %v285 = vperm.slane %v278, 0
        %vm286 = vcmp.lt.s32.totalorder %v280, %v285
        %vm287 = vcmp.lt.s32.totalorder %v281, %v285
        %vm288 = vmand %vm283, %vm286
        %vm289 = vmand %vm284, %vm287
        %v290 = vsel %vm288, 1, 0
        %v291 = vsel %vm289, 1, 0
        %v292 = vcvt.s32.f32 %v290
        %v293 = vcvt.s32.f32 %v291
        %v294 = vld [vmem:[%s240] sm:$0xff]
        %v295 = vld [vmem:[%s240 + $0x8] sm:$0xff]
        %v296 = vld [vmem:[%s240 + $0x10] sm:$0xff]
        %v297 = vld [vmem:[%s240 + $0x18] sm:$0xff]
        %v298 = vld [vmem:[%s240 + $0x20] sm:$0xff]
        %v299 = vld [vmem:[%s240 + $0x28] sm:$0xff]
        %v300 = vld [vmem:[%s240 + $0x30] sm:$0xff]
        %v301 = vld [vmem:[%s240 + $0x38] sm:$0xff]
        %v302 = vld [vmem:[%s240 + $0x40] sm:$0xff]
        %v303 = vld [vmem:[%s240 + $0x48] sm:$0xff]
        %v304 = vld [vmem:[%s240 + $0x50] sm:$0xff]
        %v305 = vld [vmem:[%s240 + $0x58] sm:$0xff]
        %v306 = vld [vmem:[%s240 + $0x60] sm:$0xff]
        %v307 = vld [vmem:[%s240 + $0x68] sm:$0xff]
        %v308 = vld [vmem:[%s240 + $0x70] sm:$0xff]
        %v309 = vld [vmem:[%s240 + $0x78] sm:$0xff]
        %310 = vmatpush.msra.mxu0 %v309
        %311 = vmatpush.msra.mxu0 %v308
        %312 = vmatpush.msra.mxu0 %v307
        %313 = vmatpush.msra.mxu0 %v306
        %314 = vmatpush.msra.mxu0 %v305
        %315 = vmatpush.msra.mxu0 %v304
        %316 = vmatpush.msra.mxu0 %v303
        %317 = vmatpush.msra.mxu0 %v302
        %318 = vmatpush.msra.mxu0 %v301
        %319 = vmatpush.msra.mxu0 %v300
        %320 = vmatpush.msra.mxu0 %v299
        %321 = vmatpush.msra.mxu0 %v298
        %322 = vmatpush.msra.mxu0 %v297
        %323 = vmatpush.msra.mxu0 %v296
        %324 = vmatpush.msra.mxu0 %v295
        %325 = vmatpush.msra.mxu0 %v294
        %326 = vmatmul.f32.gmra.mxu0 %v292
        %v327 = vpop.f32.mrf.mxu0
        %v328 = vadd.f32 0.0, %v327
        %329 = vmatmul.f32.gmra.mxu0 %v293
        %v330 = vpop.f32.mrf.mxu0
        %v331 = vadd.f32 0.0, %v330
        %332 = vdwg.mxu0
        %333 = vst [vmem:[%s271] sm:$0xff] %v328
        %334 = vst [vmem:[%s271 + $0x8] sm:$0xff] %v331
        %s335 = sand.u32 %s123, 1
        %s336 = scalar_lea.sflag [#allocation4], %s335
        %s337 = sand.u32 %s123, 1
        %s338 = smul.addr %s337, 16
        %s339 = scalar_lea.vmem [#allocation8], %s338
        // Predicated region
        $region45: #{tpu_custom_call.1} parent=31 // pred_check
          %p340 = pneg %p133
        $region46: #{tpu_custom_call.1} parent=31 // pred_check_branch
          %342 = sbr.rel (%p340) target = $region48
        $region47: #{tpu_custom_call.1} parent=31 // pred_region
          %s343 = smul.u32 2, %s28
          %345 = vsyncadd %s336, 0
          %s346 = smul.addr %s27, 6
          %s347 = sadd.s32 %s343, %s346
          %s348 = smul.addr %s347, 8
          %s349 = scalar_lea.hbm %s3, %s348
          %s350 = sshll.u32 %s339, 4
          %s351 = int_to_ptr.vmem [resolvable:$true] %s350
          %s352 = sshll.u32 %s349, 4
          %s353 = int_to_ptr.hbm [resolvable:$true] %s352
          %358 = dma.vmem_to_hbm [thread:$0]  %s351, 256, %s353, %s336, 128, 128, 8
        $region48: #{tpu_custom_call.1} parent=31 // pred_fallthru
          _
      $region32: #{tpu_custom_call.1} parent=5 // pred_fallthru
        _
      %p359 = scmp.le.s32.totalorder 2, %s18
      // Predicated region
      $region49: #{tpu_custom_call.1} parent=5 // pred_check
        %p360 = pneg %p359
      $region50: #{tpu_custom_call.1} parent=5 // pred_check_branch
        %362 = sbr.rel (%p360) target = $region52
      $region51: #{tpu_custom_call.1} parent=5 // pred_region
        %s363 = ssub.s32 %s18, 2
        // Predicated region
        $region53: #{tpu_custom_call.1} parent=51 // pred_check
          %p364 = pneg %p139
        $region54: #{tpu_custom_call.1} parent=51 // pred_check_branch
          %366 = sbr.rel (%p364) target = $region56
        $region55: #{tpu_custom_call.1} parent=51 // pred_region
          %s367 = sand.u32 %s124, 1
          %s368 = scalar_lea.sflag [#allocation4], %s367
          %s369 = sand.u32 %s124, 1
          %s370 = smul.addr %s369, 16
          %s371 = scalar_lea.vmem [#allocation8], %s370
          %373 = dma.done %s368, 256
        $region56: #{tpu_custom_call.1} parent=51 // pred_fallthru
          _
      $region52: #{tpu_custom_call.1} parent=5 // pred_fallthru
        _
    $region6: #{tpu_custom_call.1} parent=1 // loop_footer
      %s22 = sadd.s32 1, %s18
    $region7: #{tpu_custom_call.1} parent=1 // loop_footer_branch
      %17 = sbr.rel target = $region3
    $region8: #{tpu_custom_call.1} parent=1 // loop_exit
      _
    %374 = vsyncpa [#allocation3], 1
    %s375 = scalar_lea.sflag [#allocation3], 1
    %376 = vsyncpa %s375, 1
    %377 = vsyncpa [#allocation6], 1
    %s378 = scalar_lea.sflag [#allocation6], 1
    %379 = vsyncpa %s378, 1
    %380 = vsyncpa [#allocation4], 1
    %s381 = scalar_lea.sflag [#allocation4], 1
    %382 = vsyncpa %s381, 1

</llo_original>
